<compile_context>
chip_gen: v6e
topology: v6e:2x2x1
jax: 0.10.0
libtpu: 0.0.40
codegen_flags: <defaults>
</compile_context>

<pallas_src>
import functools

import jax
import jax.numpy as jnp
from jax.experimental import pallas as pl
from jax.experimental.pallas import tpu as pltpu


def _round_up(x, m):
    return ((x + m - 1) // m) * m


def _sublane_multiple(dtype):
    # Minimum second-to-last tile dim: 8 for 32-bit, 16 for 16-bit, 32 for 8-bit.
    itemsize = min(4, jnp.dtype(dtype).itemsize)
    return 32 // itemsize


def _vmem_capacity_bytes():
    try:
        info = pltpu.get_tpu_info()
        cap = getattr(info, "vmem_capacity_bytes", None)
        if cap:
            return int(cap)
    except Exception:
        pass
    return 64 * 1024 * 1024  # conservative fallback (v7x per-TC VMEM)


def _onehot_dict_kernel(x_ref, dict_ref, o_ref, *, precision):
    # x_ref:    (TM, V)       tile of the flattened (rows, V) input
    # dict_ref: (V, TE)       (tile of the) padded embedding table
    # o_ref:    (TM, TE)      tile of the output embeddings
    x = x_ref[...]                                            # (TM, V)
    # keepdims keeps everything 2-D (no 1-D vreg relayout); first-max
    # tie-breaking matches torch.argmax.
    tokens = jnp.argmax(x, axis=-1, keepdims=True)            # (TM, 1) int32
    col = jax.lax.broadcasted_iota(jnp.int32, x.shape, 1)     # (TM, V)
    # One-hot built directly in the dictionary's dtype: avoids casting the
    # whole table, and onehot @ W selects rows exactly.
    onehot = (col == tokens).astype(dict_ref.dtype)           # (TM, V)
    emb = jnp.dot(onehot, dict_ref[...],
                  preferred_element_type=jnp.float32,
                  precision=precision)                        # (TM, TE) f32
    o_ref[...] = emb.astype(o_ref.dtype)


def one_hot_dictionary(x, dictionary, *, tile_m=1024):
    """OneHotDictionary forward.

    x:          (B, N, V) float logits/scores
    dictionary: (V, E)    embedding table
    returns     (B, N, E) = dictionary[argmax(x, -1)]
    """
    B, N, V = x.shape
    Vd, E = dictionary.shape
    assert V == Vd, "vocab size of x and dictionary must match"
    BN = B * N
    out_dtype = dictionary.dtype

    x_bytes = jnp.dtype(x.dtype).itemsize
    d_bytes = jnp.dtype(dictionary.dtype).itemsize

    # ---- generation-aware VMEM budget (per TensorCore) ---------------------
    physical = _vmem_capacity_bytes()          # 128 MiB v5e/v6e, 64 MiB v7x
    budget = (physical * 55) // 100            # what the tile sizing may plan for
    vmem_limit = (physical * 3) // 4           # compiler scoped limit (headroom)

    # ---- embedding-axis tiling decision ------------------------------------
    # Lane-dense output: pad E to a multiple of 128 so output stores are
    # unmasked full-lane vst's; padding is sliced off after the call.
    E_pad = _round_up(E, 128)
    dict_bytes_full = V * E_pad * d_bytes
    dict_target = budget // 2                  # at most half the budget for the table
    if dict_bytes_full <= dict_target:
        # Whole (padded) table resident; constant block index -> single buffer.
        tile_e = E_pad
        dict_bufs = 1
    else:
        # Table too big for one resident block (e.g. v7x 64 MiB/TC): tile E.
        dict_bufs = 2                          # revisited along the E grid axis
        tile_e = max(128, ((dict_target // dict_bufs) // (V * d_bytes)) // 128 * 128)
        tile_e = min(tile_e, E_pad)
        E_pad = _round_up(E_pad, tile_e)
    n_e = E_pad // tile_e

    if E_pad != E:
        dictionary = jnp.pad(dictionary, ((0, 0), (0, E_pad - E)))

    # ---- row tile -----------------------------------------------------------
    # Sublane multiple for both the input tile and the output tile dtypes.
    sub = max(_sublane_multiple(x.dtype), _sublane_multiple(out_dtype))
    # Per-row VMEM: double-buffered x and out tiles + in-kernel intermediates
    # (one-hot in dict dtype, f32 accumulator, iota/compare temporaries).
    per_row = (2 * V * x_bytes          # x tile, double buffered
               + 2 * tile_e * d_bytes   # out tile, double buffered
               + V * d_bytes            # one-hot intermediate
               + 4 * tile_e             # f32 matmul accumulator
               + 4 * V)                 # iota / compare temporaries
    rows_budget = budget - dict_bufs * V * tile_e * d_bytes
    tile_cap = max(sub, (rows_budget // per_row) // sub * sub)
    tile_m = max(sub, min(_round_up(tile_m, sub), tile_cap, _round_up(BN, sub)))

    BN_pad = _round_up(BN, tile_m)
    x_flat = x.reshape(BN, V)
    if BN_pad != BN:
        # Pad rows: argmax of a zero row is 0 -> harmless, sliced off below.
        x_flat = jnp.pad(x_flat, ((0, BN_pad - BN), (0, 0)))
    n_rows = BN_pad // tile_m

    # Exact row selection for f32 tables needs full-precision MXU passes;
    # bf16/narrower tables are exact with the default single pass.
    precision = (jax.lax.Precision.HIGHEST if d_bytes >= 4
                 else jax.lax.Precision.DEFAULT)
    kernel = functools.partial(_onehot_dict_kernel, precision=precision)

    cost = pl.CostEstimate(
        flops=2 * BN_pad * V * E_pad,
        transcendentals=0,
        bytes_accessed=(x_bytes * BN_pad * V
                        + d_bytes * (n_rows if n_e > 1 else 1) * V * E_pad
                        + d_bytes * BN_pad * E_pad),
    )

    if n_e == 1:
        grid = (n_rows,)
        in_specs = [
            pl.BlockSpec((tile_m, V), lambda i: (i, 0)),            # input row tile
            pl.BlockSpec((V, tile_e), lambda i: (0, 0),             # full table,
                         pipeline_mode=pl.Buffered(1)),             # single-buffered
        ]
        out_specs = pl.BlockSpec((tile_m, tile_e), lambda i: (i, 0))
        dim_sem = ("parallel",)
    else:
        # Rows outer (x block loaded once per row tile), E inner.
        grid = (n_rows, n_e)
        in_specs = [
            pl.BlockSpec((tile_m, V), lambda i, j: (i, 0)),
            pl.BlockSpec((V, tile_e), lambda i, j: (0, j)),
        ]
        out_specs = pl.BlockSpec((tile_m, tile_e), lambda i, j: (i, j))
        dim_sem = ("parallel", "parallel")

    out_flat = pl.pallas_call(
        kernel,
        out_shape=jax.ShapeDtypeStruct((BN_pad, E_pad), out_dtype),
        grid_spec=pltpu.PrefetchScalarGridSpec(
            num_scalar_prefetch=0,
            grid=grid,
            in_specs=in_specs,
            out_specs=out_specs,
        ),
        compiler_params=pltpu.CompilerParams(
            dimension_semantics=dim_sem,
            vmem_limit_bytes=vmem_limit,
        ),
        cost_estimate=cost,
    )(x_flat, dictionary)

    return out_flat[:BN, :E].reshape(B, N, E)


if __name__ == "__main__":
    # Small shapes consistent with the module: B=2, N=8, vocab_size=32, emb_size=64.
    B, N, V, E = 2, 8, 32, 64

    key = jax.random.PRNGKey(0)
    k_x, k_w = jax.random.split(key)

    x = jax.random.normal(k_x, (B, N, V), dtype=jnp.float32)
    # Deterministic nn.Embedding-style init (standard normal weights).
    dictionary = jax.random.normal(k_w, (V, E), dtype=jnp.float32)

    out = one_hot_dictionary(x, dictionary)
    jax.block_until_ready(out)

    # Reference check in plain JAX (argmax + take).
    ref = jnp.take(dictionary, jnp.argmax(x, axis=-1), axis=0)
    assert out.shape == (B, N, E)
    assert jnp.allclose(out, ref, atol=1e-5), "mismatch vs. reference"

    print("KERNEL_OK")
</pallas_src>

<mosaic_0001>
module attributes {stable_mosaic.version = 11 : i64} {
  func.func @_onehot_dict_kernel(%arg0: i32, %arg1: memref<16x32xf32, #tpu.memory_space<vmem>>, %arg2: memref<32x128xf32, #tpu.memory_space<vmem>>, %arg3: memref<16x128xf32, #tpu.memory_space<vmem>>) attributes {dimension_semantics = [#tpu.dimension_semantics<parallel>], iteration_bounds = array<i64: 1>, scalar_prefetch = 0 : i64, scratch_operands = 0 : i64, tpu.core_type = #tpu.core_type<tc>, window_params = [{transform_indices = @transform_0, window_bounds = array<i64: 16, 32>}, {pipeline_mode = #tpu.pipeline_mode<synchronous>, transform_indices = @transform_1, window_bounds = array<i64: 32, 128>}, {transform_indices = @transform_2, window_bounds = array<i64: 16, 128>}]} {
    %c0 = arith.constant 0 : index
    %c0_0 = arith.constant 0 : index
    %0 = vector.load %arg1[%c0, %c0_0] : memref<16x32xf32, #tpu.memory_space<vmem>>, vector<16x32xf32>
    %1 = tpu.reduce_index %0 {axis = 1 : i32, kind = #tpu.reduction_kind<arg_max>} : vector<16x32xf32> -> vector<16xi32>
    %2 = vector.shape_cast %1 : vector<16xi32> to vector<16x1xi32>
    %3 = tpu.iota {dimensions = array<i32: 1>} : vector<16x32xi32>
    %4 = vector.broadcast %2 : vector<16x1xi32> to vector<16x32xi32>
    %5 = arith.cmpi eq, %3, %4 : vector<16x32xi32>
    %6 = arith.extui %5 : vector<16x32xi1> to vector<16x32xi32>
    %7 = arith.sitofp %6 : vector<16x32xi32> to vector<16x32xf32>
    %c0_1 = arith.constant 0 : index
    %c0_2 = arith.constant 0 : index
    %8 = vector.load %arg2[%c0_1, %c0_2] : memref<32x128xf32, #tpu.memory_space<vmem>>, vector<32x128xf32>
    %cst = arith.constant dense<0.000000e+00> : vector<16x128xf32>
    %9 = tpu.matmul %7, %8, %cst {dimension_numbers = #tpu.dot_dimension_numbers<[1], [0], [0], [1], [0, 0, 1, 1], [], []>, precision = #tpu.contract_precision<fp32>} : vector<16x32xf32>, vector<32x128xf32>, vector<16x128xf32> -> vector<16x128xf32>
    %c0_3 = arith.constant 0 : index
    %c0_4 = arith.constant 0 : index
    %10 = vector.load %arg3[%c0_3, %c0_4] : memref<16x128xf32, #tpu.memory_space<vmem>>, vector<16x128xf32>
    tpu.vector_store %arg3[%c0_3, %c0_4], %9 {strides = array<i32>} : memref<16x128xf32, #tpu.memory_space<vmem>>, vector<16x128xf32>,
    return
  }
  func.func @transform_0(%arg0: i32) -> (i32, i32) {
    %c0_i32 = arith.constant 0 : i32
    %c0_i32_0 = arith.constant 0 : i32
    return %arg0, %c0_i32 : i32, i32
  }
  func.func @transform_1(%arg0: i32) -> (i32, i32) {
    %c0_i32 = arith.constant 0 : i32
    %c0_i32_0 = arith.constant 0 : i32
    %c0_i32_1 = arith.constant 0 : i32
    return %c0_i32, %c0_i32_0 : i32, i32
  }
  func.func @transform_2(%arg0: i32) -> (i32, i32) {
    %c0_i32 = arith.constant 0 : i32
    %c0_i32_0 = arith.constant 0 : i32
    return %arg0, %c0_i32 : i32, i32
  }
}

</mosaic_0001>

<llo_original>
// kernel: tpu_custom_call.1
$region0: #{tpu_custom_call.1}
  #allocation0 [shape = 'u32[]', space=smem, size = 0x4, offset = 0x4, fixed_abs, tag = 'smem constant byte address 0x4 - core index']
  #allocation1 [shape = 'u32[144,128]{1,0:T(1,128)}', space=vmem, size = 0x12000, scoped, tag = 'internal scratch']
  %s0 = inlined_call_operand.hbm [shape: f32[16,32], index: 0, kind: input, shape index: {}]
  %s1 = inlined_call_operand.hbm [shape: f32[32,128], index: 1, kind: input, shape index: {}]
  %s2 = inlined_call_operand.hbm [shape: f32[16,128], index: 2, kind: output, shape index: {}]
  %s3 = sld [smem:[#allocation0]]
  $region26: #{tpu_custom_call.1} parent=0
    _
  %s5 = ssub.s32 1, %s3
  %s6 = scalar_select 0, %s5, %s3
  $region1: #{tpu_custom_call.1} parent=0
    #allocation2 [shape = 'u8[8192]{0}', space=vmem, size = 0x2000, scoped, tag = 'input window, operand 0, single buffered']
    #allocation3 [shape = 's32[1]{0}', space=sflag, size = 0x4, scoped, tag = 'scoped memory for tpu_custom_call.1']
    #allocation4 [shape = 's32[1]{0}', space=sflag, size = 0x4, scoped, tag = 'scoped memory for tpu_custom_call.1']
    #allocation5 [shape = 'u8[16384]{0}', space=vmem, size = 0x4000, scoped, tag = 'input window, operand 1, single buffered']
    #allocation6 [shape = 's32[1]{0}', space=sflag, size = 0x4, scoped, tag = 'scoped memory for tpu_custom_call.1']
    #allocation7 [shape = 'u8[8192]{0}', space=vmem, size = 0x2000, scoped, tag = 'output window, operand 0, single buffered']
    %7 = vsyncpa [#allocation3], 0
    %8 = vsyncpa [#allocation6], 0
    %9 = vsyncpa [#allocation4], 0
    // Predicated region
    $region2: #{tpu_custom_call.1} parent=1 // pred_check
      _
    $region3: #{tpu_custom_call.1} parent=1 // pred_check_branch
      %11 = sbr.rel (0) target = $region5
    $region4: #{tpu_custom_call.1} parent=1 // pred_region
      %s13 = ssub.s32 256, 256
      %14 = vsyncadd [#allocation3], %s13
      %s15 = sshll.u32 [#allocation2], 4
      %s16 = int_to_ptr.vmem [resolvable:$true] %s15
      %21 = dma.hbm_to_vmem [thread:$0]  %s0, 256, %s16, [#allocation3], 128, 128, 8
    $region5: #{tpu_custom_call.1} parent=1 // pred_fallthru
      _
    // Predicated region
    $region6: #{tpu_custom_call.1} parent=1 // pred_check
      _
    $region7: #{tpu_custom_call.1} parent=1 // pred_check_branch
      %23 = sbr.rel (0) target = $region9
    $region8: #{tpu_custom_call.1} parent=1 // pred_region
      %s25 = ssub.s32 512, 512
      %26 = vsyncadd [#allocation6], %s25
      %s27 = sshll.u32 [#allocation5], 4
      %s28 = int_to_ptr.vmem [resolvable:$true] %s27
      %33 = dma.hbm_to_vmem [thread:$0]  %s1, 512, %s28, [#allocation6], 128, 128, 8
    $region9: #{tpu_custom_call.1} parent=1 // pred_fallthru
      _
    // Predicated region
    $region10: #{tpu_custom_call.1} parent=1 // pred_check
      _
    $region11: #{tpu_custom_call.1} parent=1 // pred_check_branch
      %35 = sbr.rel (0) target = $region13
    $region12: #{tpu_custom_call.1} parent=1 // pred_region
      %36 = dma.done [#allocation3], 256
    $region13: #{tpu_custom_call.1} parent=1 // pred_fallthru
      _
    // Predicated region
    $region14: #{tpu_custom_call.1} parent=1 // pred_check
      _
    $region15: #{tpu_custom_call.1} parent=1 // pred_check_branch
      %38 = sbr.rel (0) target = $region17
    $region16: #{tpu_custom_call.1} parent=1 // pred_region
      %39 = dma.done [#allocation6], 512
    $region17: #{tpu_custom_call.1} parent=1 // pred_fallthru
      _
    %v40 = vld [vmem:[#allocation2] sm:$0xff]
    %v41 = vld [vmem:[#allocation2 + $0x8] sm:$0xff]
    %vm42 = vcmask 261120
    %v43 = vsel %vm42, %v40, -inf
    %44 = vmax.index.xlane.f32.xlu0 %v43
    %v45 = vpop.xlane.xlu0 %44
    %v46 = vsel %vm42, %v41, -inf
    %47 = vmax.index.xlane.f32.xlu0 %v46
    %v48 = vpop.xlane.xlu0 %47
    %v49 = vlaneseq
    %v50 = vand.u32 %v49, 127
    %vm51 = vcmp.eq.s32.totalorder %v50, %v45
    %vm52 = vcmp.eq.s32.totalorder %v50, %v48
    %v53 = vsel %vm51, 1, 0
    %v54 = vsel %vm52, 1, 0
    %v55 = vcvt.s32.f32 %v53
    %v56 = vcvt.s32.f32 %v54
    %v57 = vld [vmem:[#allocation5] sm:$0xff]
    %v58 = vld [vmem:[#allocation5 + $0x8] sm:$0xff]
    %v59 = vld [vmem:[#allocation5 + $0x10] sm:$0xff]
    %v60 = vld [vmem:[#allocation5 + $0x18] sm:$0xff]
    %v62 = vsel %vm42, %v55, 0
    %v65 = vsel %vm42, %v56, 0
    %67 = vmatprep.subr.mxu0 0.0
    %68 = vmatpush1.msra.mxu0 0.0
    %69 = vmatprep.subr.mxu0 0.0
    %70 = vmatpush1.msra.mxu0 0.0
    %71 = vmatprep.subr.mxu0 0.0
    %72 = vmatpush1.msra.mxu0 0.0
    %73 = vmatprep.subr.mxu0 0.0
    %74 = vmatpush1.msra.mxu0 0.0
    %75 = vmatprep.subr.mxu0 0.0
    %76 = vmatpush1.msra.mxu0 0.0
    %77 = vmatprep.subr.mxu0 0.0
    %78 = vmatpush1.msra.mxu0 0.0
    %79 = vmatprep.subr.mxu0 0.0
    %80 = vmatpush1.msra.mxu0 0.0
    %81 = vmatprep.subr.mxu0 0.0
    %82 = vmatpush1.msra.mxu0 0.0
    %83 = vmatprep.subr.mxu0 0.0
    %84 = vmatpush1.msra.mxu0 0.0
    %85 = vmatprep.subr.mxu0 0.0
    %86 = vmatpush1.msra.mxu0 0.0
    %87 = vmatprep.subr.mxu0 0.0
    %88 = vmatpush1.msra.mxu0 0.0
    %89 = vmatprep.subr.mxu0 0.0
    %90 = vmatpush1.msra.mxu0 0.0
    %91 = vmatprep.subr.mxu0 0.0
    %v92 = vand.u32 %v60, 4294901760
    %93 = vmatpush1.msra.mxu0 %v92
    %94 = vmatprep.subr.mxu0 0.0
    %v95 = vand.u32 %v59, 4294901760
    %96 = vmatpush1.msra.mxu0 %v95
    %97 = vmatprep.subr.mxu0 0.0
    %v98 = vand.u32 %v58, 4294901760
    %99 = vmatpush1.msra.mxu0 %v98
    %100 = vmatprep.subr.mxu0 0.0
    %v101 = vand.u32 %v57, 4294901760
    %102 = vmatpush1.msra.mxu0 %v101
    %103 = vmatprep.subr.mxu0 0.0
    %104 = vmatpush2.msra.mxu0 0.0
    %105 = vmatprep.subr.mxu0 0.0
    %106 = vmatpush2.msra.mxu0 0.0
    %107 = vmatprep.subr.mxu0 0.0
    %108 = vmatpush2.msra.mxu0 0.0
    %109 = vmatprep.subr.mxu0 0.0
    %110 = vmatpush2.msra.mxu0 0.0
    %111 = vmatprep.subr.mxu0 0.0
    %112 = vmatpush2.msra.mxu0 0.0
    %113 = vmatprep.subr.mxu0 0.0
    %114 = vmatpush2.msra.mxu0 0.0
    %115 = vmatprep.subr.mxu0 0.0
    %116 = vmatpush2.msra.mxu0 0.0
    %117 = vmatprep.subr.mxu0 0.0
    %118 = vmatpush2.msra.mxu0 0.0
    %119 = vmatprep.subr.mxu0 0.0
    %120 = vmatpush2.msra.mxu0 0.0
    %121 = vmatprep.subr.mxu0 0.0
    %122 = vmatpush2.msra.mxu0 0.0
    %123 = vmatprep.subr.mxu0 0.0
    %124 = vmatpush2.msra.mxu0 0.0
    %125 = vmatprep.subr.mxu0 0.0
    %126 = vmatpush2.msra.mxu0 0.0
    %127 = vmatprep.subr.mxu0 0.0
    %128 = vmatpush2.msra.mxu0 0.0
    %129 = vmatprep.subr.mxu0 0.0
    %130 = vmatpush2.msra.mxu0 0.0
    %131 = vmatprep.subr.mxu0 0.0
    %132 = vmatpush2.msra.mxu0 0.0
    %133 = vmatprep.subr.mxu0 0.0
    %134 = vmatpush2.msra.mxu0 0.0
    %135 = vmatprep.mubr.f32.mxu0 0.0
    %v136 = vand.u32 %v62, 4294901760
    %v137 = vsub.f32 %v62, %v136
    %v138 = vand.u32 %v137, 4294901760
    %v139 = vsub.f32 %v137, %v138
    %v140 = vand.u32 %v139, 4294901760
    %141 = vmatmul.mubr.f32.gmra.mxu0 %v140
    %v142 = vpop.f32.mrf.mxu0
    %v143 = vadd.f32 0.0, %v142
    %v144 = vpop.f32.mrf.mxu0
    %145 = vmatprep.mubr.f32.mxu0 0.0
    %v146 = vand.u32 %v65, 4294901760
    %v147 = vsub.f32 %v65, %v146
    %v148 = vand.u32 %v147, 4294901760
    %v149 = vsub.f32 %v147, %v148
    %v150 = vand.u32 %v149, 4294901760
    %151 = vmatmul.mubr.f32.gmra.mxu0 %v150
    %v152 = vpop.f32.mrf.mxu0
    %v153 = vadd.f32 0.0, %v152
    %v154 = vpop.f32.mrf.mxu0
    %155 = vdwg.mxu0
    %156 = vmatprep.subr.mxu0 0.0
    %157 = vmatpush1.msra.mxu0 0.0
    %158 = vmatprep.subr.mxu0 0.0
    %159 = vmatpush1.msra.mxu0 0.0
    %160 = vmatprep.subr.mxu0 0.0
    %161 = vmatpush1.msra.mxu0 0.0
    %162 = vmatprep.subr.mxu0 0.0
    %163 = vmatpush1.msra.mxu0 0.0
    %164 = vmatprep.subr.mxu0 0.0
    %165 = vmatpush1.msra.mxu0 0.0
    %166 = vmatprep.subr.mxu0 0.0
    %167 = vmatpush1.msra.mxu0 0.0
    %168 = vmatprep.subr.mxu0 0.0
    %169 = vmatpush1.msra.mxu0 0.0
    %170 = vmatprep.subr.mxu0 0.0
    %171 = vmatpush1.msra.mxu0 0.0
    %172 = vmatprep.subr.mxu0 0.0
    %173 = vmatpush1.msra.mxu0 0.0
    %174 = vmatprep.subr.mxu0 0.0
    %175 = vmatpush1.msra.mxu0 0.0
    %176 = vmatprep.subr.mxu0 0.0
    %177 = vmatpush1.msra.mxu0 0.0
    %178 = vmatprep.subr.mxu0 0.0
    %179 = vmatpush1.msra.mxu0 0.0
    %180 = vmatprep.subr.mxu0 0.0
    %v181 = vand.u32 %v60, 4294901760
    %v182 = vsub.f32 %v60, %v181
    %v183 = vand.u32 %v182, 4294901760
    %v184 = vsub.f32 %v182, %v183
    %v185 = vand.u32 %v184, 4294901760
    %186 = vmatpush1.msra.mxu0 %v185
    %187 = vmatprep.subr.mxu0 0.0
    %v188 = vand.u32 %v59, 4294901760
    %v189 = vsub.f32 %v59, %v188
    %v190 = vand.u32 %v189, 4294901760
    %v191 = vsub.f32 %v189, %v190
    %v192 = vand.u32 %v191, 4294901760
    %193 = vmatpush1.msra.mxu0 %v192
    %194 = vmatprep.subr.mxu0 0.0
    %v195 = vand.u32 %v58, 4294901760
    %v196 = vsub.f32 %v58, %v195
    %v197 = vand.u32 %v196, 4294901760
    %v198 = vsub.f32 %v196, %v197
    %v199 = vand.u32 %v198, 4294901760
    %200 = vmatpush1.msra.mxu0 %v199
    %201 = vmatprep.subr.mxu0 0.0
    %v202 = vand.u32 %v57, 4294901760
    %v203 = vsub.f32 %v57, %v202
    %v204 = vand.u32 %v203, 4294901760
    %v205 = vsub.f32 %v203, %v204
    %v206 = vand.u32 %v205, 4294901760
    %207 = vmatpush1.msra.mxu0 %v206
    %208 = vmatprep.subr.mxu0 0.0
    %209 = vmatpush2.msra.mxu0 0.0
    %210 = vmatprep.subr.mxu0 0.0
    %211 = vmatpush2.msra.mxu0 0.0
    %212 = vmatprep.subr.mxu0 0.0
    %213 = vmatpush2.msra.mxu0 0.0
    %214 = vmatprep.subr.mxu0 0.0
    %215 = vmatpush2.msra.mxu0 0.0
    %216 = vmatprep.subr.mxu0 0.0
    %217 = vmatpush2.msra.mxu0 0.0
    %218 = vmatprep.subr.mxu0 0.0
    %219 = vmatpush2.msra.mxu0 0.0
    %220 = vmatprep.subr.mxu0 0.0
    %221 = vmatpush2.msra.mxu0 0.0
    %222 = vmatprep.subr.mxu0 0.0
    %223 = vmatpush2.msra.mxu0 0.0
    %224 = vmatprep.subr.mxu0 0.0
    %225 = vmatpush2.msra.mxu0 0.0
    %226 = vmatprep.subr.mxu0 0.0
    %227 = vmatpush2.msra.mxu0 0.0
    %228 = vmatprep.subr.mxu0 0.0
    %229 = vmatpush2.msra.mxu0 0.0
    %230 = vmatprep.subr.mxu0 0.0
    %231 = vmatpush2.msra.mxu0 0.0
    %232 = vmatprep.subr.mxu0 0.0
    %233 = vmatpush2.msra.mxu0 0.0
    %234 = vmatprep.subr.mxu0 0.0
    %235 = vmatpush2.msra.mxu0 0.0
    %236 = vmatprep.subr.mxu0 0.0
    %237 = vmatpush2.msra.mxu0 0.0
    %238 = vmatprep.subr.mxu0 0.0
    %239 = vmatpush2.msra.mxu0 0.0
    %240 = vmatprep.mubr.f32.mxu0 0.0
    %v241 = vand.u32 %v62, 4294901760
    %242 = vmatmul.mubr.f32.gmra.mxu0 %v241
    %v243 = vpop.f32.mrf.mxu0
    %v244 = vadd.f32 %v143, %v243
    %v245 = vpop.f32.mrf.mxu0
    %246 = vmatprep.mubr.f32.mxu0 0.0
    %v247 = vand.u32 %v65, 4294901760
    %248 = vmatmul.mubr.f32.gmra.mxu0 %v247
    %v249 = vpop.f32.mrf.mxu0
    %v250 = vadd.f32 %v153, %v249
    %v251 = vpop.f32.mrf.mxu0
    %252 = vdwg.mxu0
    %253 = vmatprep.subr.mxu0 0.0
    %254 = vmatpush1.msra.mxu0 0.0
    %255 = vmatprep.subr.mxu0 0.0
    %256 = vmatpush1.msra.mxu0 0.0
    %257 = vmatprep.subr.mxu0 0.0
    %258 = vmatpush1.msra.mxu0 0.0
    %259 = vmatprep.subr.mxu0 0.0
    %260 = vmatpush1.msra.mxu0 0.0
    %261 = vmatprep.subr.mxu0 0.0
    %262 = vmatpush1.msra.mxu0 0.0
    %263 = vmatprep.subr.mxu0 0.0
    %264 = vmatpush1.msra.mxu0 0.0
    %265 = vmatprep.subr.mxu0 0.0
    %266 = vmatpush1.msra.mxu0 0.0
    %267 = vmatprep.subr.mxu0 0.0
    %268 = vmatpush1.msra.mxu0 0.0
    %269 = vmatprep.subr.mxu0 0.0
    %270 = vmatpush1.msra.mxu0 0.0
    %271 = vmatprep.subr.mxu0 0.0
    %272 = vmatpush1.msra.mxu0 0.0
    %273 = vmatprep.subr.mxu0 0.0
    %274 = vmatpush1.msra.mxu0 0.0
    %275 = vmatprep.subr.mxu0 0.0
    %276 = vmatpush1.msra.mxu0 0.0
    %277 = vmatprep.subr.mxu0 0.0
    %v278 = vand.u32 %v60, 4294901760
    %v279 = vsub.f32 %v60, %v278
    %280 = vmatpush1.msra.mxu0 %v279
    %281 = vmatprep.subr.mxu0 0.0
    %v282 = vand.u32 %v59, 4294901760
    %v283 = vsub.f32 %v59, %v282
    %284 = vmatpush1.msra.mxu0 %v283
    %285 = vmatprep.subr.mxu0 0.0
    %v286 = vand.u32 %v58, 4294901760
    %v287 = vsub.f32 %v58, %v286
    %288 = vmatpush1.msra.mxu0 %v287
    %289 = vmatprep.subr.mxu0 0.0
    %v290 = vand.u32 %v57, 4294901760
    %v291 = vsub.f32 %v57, %v290
    %292 = vmatpush1.msra.mxu0 %v291
    %293 = vmatprep.subr.mxu0 0.0
    %294 = vmatpush2.msra.mxu0 0.0
    %295 = vmatprep.subr.mxu0 0.0
    %296 = vmatpush2.msra.mxu0 0.0
    %297 = vmatprep.subr.mxu0 0.0
    %298 = vmatpush2.msra.mxu0 0.0
    %299 = vmatprep.subr.mxu0 0.0
    %300 = vmatpush2.msra.mxu0 0.0
    %301 = vmatprep.subr.mxu0 0.0
    %302 = vmatpush2.msra.mxu0 0.0
    %303 = vmatprep.subr.mxu0 0.0
    %304 = vmatpush2.msra.mxu0 0.0
    %305 = vmatprep.subr.mxu0 0.0
    %306 = vmatpush2.msra.mxu0 0.0
    %307 = vmatprep.subr.mxu0 0.0
    %308 = vmatpush2.msra.mxu0 0.0
    %309 = vmatprep.subr.mxu0 0.0
    %310 = vmatpush2.msra.mxu0 0.0
    %311 = vmatprep.subr.mxu0 0.0
    %312 = vmatpush2.msra.mxu0 0.0
    %313 = vmatprep.subr.mxu0 0.0
    %314 = vmatpush2.msra.mxu0 0.0
    %315 = vmatprep.subr.mxu0 0.0
    %316 = vmatpush2.msra.mxu0 0.0
    %317 = vmatprep.subr.mxu0 0.0
    %318 = vmatpush2.msra.mxu0 0.0
    %319 = vmatprep.subr.mxu0 0.0
    %320 = vmatpush2.msra.mxu0 0.0
    %321 = vmatprep.subr.mxu0 0.0
    %322 = vmatpush2.msra.mxu0 0.0
    %323 = vmatprep.subr.mxu0 0.0
    %324 = vmatpush2.msra.mxu0 0.0
    %325 = vmatprep.mubr.f32.mxu0 0.0
    %v326 = vand.u32 %v62, 4294901760
    %v327 = vsub.f32 %v62, %v326
    %328 = vmatmul.mubr.f32.gmra.mxu0 %v327
    %v329 = vpop.f32.mrf.mxu0
    %v330 = vadd.f32 %v244, %v329
    %v331 = vpop.f32.mrf.mxu0
    %332 = vmatprep.mubr.f32.mxu0 0.0
    %v333 = vand.u32 %v65, 4294901760
    %v334 = vsub.f32 %v65, %v333
    %335 = vmatmul.mubr.f32.gmra.mxu0 %v334
    %v336 = vpop.f32.mrf.mxu0
    %v337 = vadd.f32 %v250, %v336
    %v338 = vpop.f32.mrf.mxu0
    %339 = vdwg.mxu0
    %340 = vmatprep.subr.mxu0 0.0
    %341 = vmatpush1.msra.mxu0 0.0
    %342 = vmatprep.subr.mxu0 0.0
    %343 = vmatpush1.msra.mxu0 0.0
    %344 = vmatprep.subr.mxu0 0.0
    %345 = vmatpush1.msra.mxu0 0.0
    %346 = vmatprep.subr.mxu0 0.0
    %347 = vmatpush1.msra.mxu0 0.0
    %348 = vmatprep.subr.mxu0 0.0
    %349 = vmatpush1.msra.mxu0 0.0
    %350 = vmatprep.subr.mxu0 0.0
    %351 = vmatpush1.msra.mxu0 0.0
    %352 = vmatprep.subr.mxu0 0.0
    %353 = vmatpush1.msra.mxu0 0.0
    %354 = vmatprep.subr.mxu0 0.0
    %355 = vmatpush1.msra.mxu0 0.0
    %356 = vmatprep.subr.mxu0 0.0
    %357 = vmatpush1.msra.mxu0 0.0
    %358 = vmatprep.subr.mxu0 0.0
    %359 = vmatpush1.msra.mxu0 0.0
    %360 = vmatprep.subr.mxu0 0.0
    %361 = vmatpush1.msra.mxu0 0.0
    %362 = vmatprep.subr.mxu0 0.0
    %363 = vmatpush1.msra.mxu0 0.0
    %364 = vmatprep.subr.mxu0 0.0
    %v365 = vand.u32 %v60, 4294901760
    %366 = vmatpush1.msra.mxu0 %v365
    %367 = vmatprep.subr.mxu0 0.0
    %v368 = vand.u32 %v59, 4294901760
    %369 = vmatpush1.msra.mxu0 %v368
    %370 = vmatprep.subr.mxu0 0.0
    %v371 = vand.u32 %v58, 4294901760
    %372 = vmatpush1.msra.mxu0 %v371
    %373 = vmatprep.subr.mxu0 0.0
    %v374 = vand.u32 %v57, 4294901760
    %375 = vmatpush1.msra.mxu0 %v374
    %376 = vmatprep.subr.mxu0 0.0
    %377 = vmatpush2.msra.mxu0 0.0
    %378 = vmatprep.subr.mxu0 0.0
    %379 = vmatpush2.msra.mxu0 0.0
    %380 = vmatprep.subr.mxu0 0.0
    %381 = vmatpush2.msra.mxu0 0.0
    %382 = vmatprep.subr.mxu0 0.0
    %383 = vmatpush2.msra.mxu0 0.0
    %384 = vmatprep.subr.mxu0 0.0
    %385 = vmatpush2.msra.mxu0 0.0
    %386 = vmatprep.subr.mxu0 0.0
    %387 = vmatpush2.msra.mxu0 0.0
    %388 = vmatprep.subr.mxu0 0.0
    %389 = vmatpush2.msra.mxu0 0.0
    %390 = vmatprep.subr.mxu0 0.0
    %391 = vmatpush2.msra.mxu0 0.0
    %392 = vmatprep.subr.mxu0 0.0
    %393 = vmatpush2.msra.mxu0 0.0
    %394 = vmatprep.subr.mxu0 0.0
    %395 = vmatpush2.msra.mxu0 0.0
    %396 = vmatprep.subr.mxu0 0.0
    %397 = vmatpush2.msra.mxu0 0.0
    %398 = vmatprep.subr.mxu0 0.0
    %399 = vmatpush2.msra.mxu0 0.0
    %400 = vmatprep.subr.mxu0 0.0
    %401 = vmatpush2.msra.mxu0 0.0
    %402 = vmatprep.subr.mxu0 0.0
    %403 = vmatpush2.msra.mxu0 0.0
    %404 = vmatprep.subr.mxu0 0.0
    %405 = vmatpush2.msra.mxu0 0.0
    %406 = vmatprep.subr.mxu0 0.0
    %407 = vmatpush2.msra.mxu0 0.0
    %408 = vmatprep.mubr.f32.mxu0 0.0
    %v409 = vand.u32 %v62, 4294901760
    %v410 = vsub.f32 %v62, %v409
    %v411 = vand.u32 %v410, 4294901760
    %412 = vmatmul.mubr.f32.gmra.mxu0 %v411
    %v413 = vpop.f32.mrf.mxu0
    %v414 = vadd.f32 %v330, %v413
    %v415 = vpop.f32.mrf.mxu0
    %416 = vmatprep.mubr.f32.mxu0 0.0
    %v417 = vand.u32 %v65, 4294901760
    %v418 = vsub.f32 %v65, %v417
    %v419 = vand.u32 %v418, 4294901760
    %420 = vmatmul.mubr.f32.gmra.mxu0 %v419
    %v421 = vpop.f32.mrf.mxu0
    %v422 = vadd.f32 %v337, %v421
    %v423 = vpop.f32.mrf.mxu0
    %424 = vdwg.mxu0
    %425 = vmatprep.subr.mxu0 0.0
    %426 = vmatpush1.msra.mxu0 0.0
    %427 = vmatprep.subr.mxu0 0.0
    %428 = vmatpush1.msra.mxu0 0.0
    %429 = vmatprep.subr.mxu0 0.0
    %430 = vmatpush1.msra.mxu0 0.0
    %431 = vmatprep.subr.mxu0 0.0
    %432 = vmatpush1.msra.mxu0 0.0
    %433 = vmatprep.subr.mxu0 0.0
    %434 = vmatpush1.msra.mxu0 0.0
    %435 = vmatprep.subr.mxu0 0.0
    %436 = vmatpush1.msra.mxu0 0.0
    %437 = vmatprep.subr.mxu0 0.0
    %438 = vmatpush1.msra.mxu0 0.0
    %439 = vmatprep.subr.mxu0 0.0
    %440 = vmatpush1.msra.mxu0 0.0
    %441 = vmatprep.subr.mxu0 0.0
    %442 = vmatpush1.msra.mxu0 0.0
    %443 = vmatprep.subr.mxu0 0.0
    %444 = vmatpush1.msra.mxu0 0.0
    %445 = vmatprep.subr.mxu0 0.0
    %446 = vmatpush1.msra.mxu0 0.0
    %447 = vmatprep.subr.mxu0 0.0
    %448 = vmatpush1.msra.mxu0 0.0
    %449 = vmatprep.subr.mxu0 0.0
    %v450 = vand.u32 %v60, 4294901760
    %v451 = vsub.f32 %v60, %v450
    %v452 = vand.u32 %v451, 4294901760
    %453 = vmatpush1.msra.mxu0 %v452
    %454 = vmatprep.subr.mxu0 0.0
    %v455 = vand.u32 %v59, 4294901760
    %v456 = vsub.f32 %v59, %v455
    %v457 = vand.u32 %v456, 4294901760
    %458 = vmatpush1.msra.mxu0 %v457
    %459 = vmatprep.subr.mxu0 0.0
    %v460 = vand.u32 %v58, 4294901760
    %v461 = vsub.f32 %v58, %v460
    %v462 = vand.u32 %v461, 4294901760
    %463 = vmatpush1.msra.mxu0 %v462
    %464 = vmatprep.subr.mxu0 0.0
    %v465 = vand.u32 %v57, 4294901760
    %v466 = vsub.f32 %v57, %v465
    %v467 = vand.u32 %v466, 4294901760
    %468 = vmatpush1.msra.mxu0 %v467
    %469 = vmatprep.subr.mxu0 0.0
    %470 = vmatpush2.msra.mxu0 0.0
    %471 = vmatprep.subr.mxu0 0.0
    %472 = vmatpush2.msra.mxu0 0.0
    %473 = vmatprep.subr.mxu0 0.0
    %474 = vmatpush2.msra.mxu0 0.0
    %475 = vmatprep.subr.mxu0 0.0
    %476 = vmatpush2.msra.mxu0 0.0
    %477 = vmatprep.subr.mxu0 0.0
    %478 = vmatpush2.msra.mxu0 0.0
    %479 = vmatprep.subr.mxu0 0.0
    %480 = vmatpush2.msra.mxu0 0.0
    %481 = vmatprep.subr.mxu0 0.0
    %482 = vmatpush2.msra.mxu0 0.0
    %483 = vmatprep.subr.mxu0 0.0
    %484 = vmatpush2.msra.mxu0 0.0
    %485 = vmatprep.subr.mxu0 0.0
    %486 = vmatpush2.msra.mxu0 0.0
    %487 = vmatprep.subr.mxu0 0.0
    %488 = vmatpush2.msra.mxu0 0.0
    %489 = vmatprep.subr.mxu0 0.0
    %490 = vmatpush2.msra.mxu0 0.0
    %491 = vmatprep.subr.mxu0 0.0
    %492 = vmatpush2.msra.mxu0 0.0
    %493 = vmatprep.subr.mxu0 0.0
    %494 = vmatpush2.msra.mxu0 0.0
    %495 = vmatprep.subr.mxu0 0.0
    %496 = vmatpush2.msra.mxu0 0.0
    %497 = vmatprep.subr.mxu0 0.0
    %498 = vmatpush2.msra.mxu0 0.0
    %499 = vmatprep.subr.mxu0 0.0
    %500 = vmatpush2.msra.mxu0 0.0
    %501 = vmatprep.mubr.f32.mxu0 0.0
    %v502 = vand.u32 %v62, 4294901760
    %503 = vmatmul.mubr.f32.gmra.mxu0 %v502
    %v504 = vpop.f32.mrf.mxu0
    %v505 = vadd.f32 %v414, %v504
    %v506 = vpop.f32.mrf.mxu0
    %507 = vmatprep.mubr.f32.mxu0 0.0
    %v508 = vand.u32 %v65, 4294901760
    %509 = vmatmul.mubr.f32.gmra.mxu0 %v508
    %v510 = vpop.f32.mrf.mxu0
    %v511 = vadd.f32 %v422, %v510
    %v512 = vpop.f32.mrf.mxu0
    %513 = vdwg.mxu0
    %514 = vmatprep.subr.mxu0 0.0
    %515 = vmatpush1.msra.mxu0 0.0
    %516 = vmatprep.subr.mxu0 0.0
    %517 = vmatpush1.msra.mxu0 0.0
    %518 = vmatprep.subr.mxu0 0.0
    %519 = vmatpush1.msra.mxu0 0.0
    %520 = vmatprep.subr.mxu0 0.0
    %521 = vmatpush1.msra.mxu0 0.0
    %522 = vmatprep.subr.mxu0 0.0
    %523 = vmatpush1.msra.mxu0 0.0
    %524 = vmatprep.subr.mxu0 0.0
    %525 = vmatpush1.msra.mxu0 0.0
    %526 = vmatprep.subr.mxu0 0.0
    %527 = vmatpush1.msra.mxu0 0.0
    %528 = vmatprep.subr.mxu0 0.0
    %529 = vmatpush1.msra.mxu0 0.0
    %530 = vmatprep.subr.mxu0 0.0
    %531 = vmatpush1.msra.mxu0 0.0
    %532 = vmatprep.subr.mxu0 0.0
    %533 = vmatpush1.msra.mxu0 0.0
    %534 = vmatprep.subr.mxu0 0.0
    %535 = vmatpush1.msra.mxu0 0.0
    %536 = vmatprep.subr.mxu0 0.0
    %537 = vmatpush1.msra.mxu0 0.0
    %538 = vmatprep.subr.mxu0 0.0
    %v539 = vand.u32 %v60, 4294901760
    %540 = vmatpush1.msra.mxu0 %v539
    %541 = vmatprep.subr.mxu0 0.0
    %v542 = vand.u32 %v59, 4294901760
    %543 = vmatpush1.msra.mxu0 %v542
    %544 = vmatprep.subr.mxu0 0.0
    %v545 = vand.u32 %v58, 4294901760
    %546 = vmatpush1.msra.mxu0 %v545
    %547 = vmatprep.subr.mxu0 0.0
    %v548 = vand.u32 %v57, 4294901760
    %549 = vmatpush1.msra.mxu0 %v548
    %550 = vmatprep.subr.mxu0 0.0
    %551 = vmatpush2.msra.mxu0 0.0
    %552 = vmatprep.subr.mxu0 0.0
    %553 = vmatpush2.msra.mxu0 0.0
    %554 = vmatprep.subr.mxu0 0.0
    %555 = vmatpush2.msra.mxu0 0.0
    %556 = vmatprep.subr.mxu0 0.0
    %557 = vmatpush2.msra.mxu0 0.0
    %558 = vmatprep.subr.mxu0 0.0
    %559 = vmatpush2.msra.mxu0 0.0
    %560 = vmatprep.subr.mxu0 0.0
    %561 = vmatpush2.msra.mxu0 0.0
    %562 = vmatprep.subr.mxu0 0.0
    %563 = vmatpush2.msra.mxu0 0.0
    %564 = vmatprep.subr.mxu0 0.0
    %565 = vmatpush2.msra.mxu0 0.0
    %566 = vmatprep.subr.mxu0 0.0
    %567 = vmatpush2.msra.mxu0 0.0
    %568 = vmatprep.subr.mxu0 0.0
    %569 = vmatpush2.msra.mxu0 0.0
    %570 = vmatprep.subr.mxu0 0.0
    %571 = vmatpush2.msra.mxu0 0.0
    %572 = vmatprep.subr.mxu0 0.0
    %573 = vmatpush2.msra.mxu0 0.0
    %574 = vmatprep.subr.mxu0 0.0
    %575 = vmatpush2.msra.mxu0 0.0
    %576 = vmatprep.subr.mxu0 0.0
    %577 = vmatpush2.msra.mxu0 0.0
    %578 = vmatprep.subr.mxu0 0.0
    %579 = vmatpush2.msra.mxu0 0.0
    %580 = vmatprep.subr.mxu0 0.0
    %581 = vmatpush2.msra.mxu0 0.0
    %582 = vmatprep.mubr.f32.mxu0 0.0
    %v583 = vand.u32 %v62, 4294901760
    %584 = vmatmul.mubr.f32.gmra.mxu0 %v583
    %v585 = vpop.f32.mrf.mxu0
    %v586 = vadd.f32 %v505, %v585
    %v587 = vpop.f32.mrf.mxu0
    %588 = vmatprep.mubr.f32.mxu0 0.0
    %v589 = vand.u32 %v65, 4294901760
    %590 = vmatmul.mubr.f32.gmra.mxu0 %v589
    %v591 = vpop.f32.mrf.mxu0
    %v592 = vadd.f32 %v511, %v591
    %v593 = vpop.f32.mrf.mxu0
    %594 = vdwg.mxu0
    %595 = vst [vmem:[#allocation7] sm:$0xff] %v586
    %596 = vst [vmem:[#allocation7 + $0x8] sm:$0xff] %v592
    // Predicated region
    $region18: #{tpu_custom_call.1} parent=1 // pred_check
      _
    $region19: #{tpu_custom_call.1} parent=1 // pred_check_branch
      %598 = sbr.rel (0) target = $region21
    $region20: #{tpu_custom_call.1} parent=1 // pred_region
      %s600 = ssub.s32 256, 256
      %601 = vsyncadd [#allocation4], %s600
      %s602 = sshll.u32 [#allocation7], 4
      %s603 = int_to_ptr.vmem [resolvable:$true] %s602
      %608 = dma.vmem_to_hbm [thread:$0]  %s603, 256, %s2, [#allocation4], 128, 128, 8
    $region21: #{tpu_custom_call.1} parent=1 // pred_fallthru
      _
    // Predicated region
    $region22: #{tpu_custom_call.1} parent=1 // pred_check
      _
    $region23: #{tpu_custom_call.1} parent=1 // pred_check_branch
      %610 = sbr.rel (0) target = $region25
    $region24: #{tpu_custom_call.1} parent=1 // pred_region
      %611 = dma.done [#allocation4], 256
    $region25: #{tpu_custom_call.1} parent=1 // pred_fallthru
      _
    %612 = vsyncpa [#allocation3], 1
    %613 = vsyncpa [#allocation6], 1
    %614 = vsyncpa [#allocation4], 1

</llo_original>
